<compile_context>
chip_gen: v6e
topology: v6e:2x2x1
jax: 0.10.0
libtpu: 0.0.40
codegen_flags: <defaults>
</compile_context>

<pallas_src>
import jax
import jax.numpy as jnp
from jax import lax
from jax.experimental import pallas as pl
from jax.experimental.pallas import tpu as pltpu


def _make_kernel(H, W, cin, cout, b_tile, use_proj):
    P = H * W                                 # pixels (lanes) per image
    # the 9 taps of a 3x3 / pad=1 conv: (dy, dx, flattened-pixel offset)
    TAPS = [(dy, dx, dy * W + dx) for dy in (-1, 0, 1) for dx in (-1, 0, 1)]
    CENTER = 4                                # dy = dx = 0

    def kernel(*refs):
        if use_proj:
            x_ref, w1_ref, pc_ref, masks_ref, w3_ref, o_ref = refs
        else:
            x_ref, w1_ref, pc_ref, masks_ref, o_ref = refs
            w3_ref = None

        # Load the small parameter blocks once per step and slice the *values* below
        # (avoids re-slicing refs / repeated tiny vlds; JAX does not CSE broadcasts).
        w1 = w1_ref[...]                       # (cout, 9*cin) im2col conv1 weights
        pc = pc_ref[...]                       # (cout, 13|15): [w2 taps | s1 b1 s2 b2 (s3 b3)]
        w3 = w3_ref[...] if use_proj else None  # (cout, cin)

        def shift(a, dp):
            # shifted[:, p] = a[:, p + dp]. Wrapped lanes always land on positions whose
            # border mask is 0 for that tap - true for every tap of a 3x3 / pad=1 stencil,
            # so zero padding never needs a padded copy. (Invariant breaks for larger
            # kernels / dilation / stride; revisit if TAPS ever changes.)
            if dp == 0:
                return a
            return pltpu.roll(a, shift=(-dp) % P, axis=1)

        for b in range(b_tile):                # unrolled: images within one grid step
            x = x_ref[b]                       # (cin, P) lane-dense view of image b

            # ---- conv1 (3x3, cin->cout): im2col built in vregs, ONE MXU matmul ----
            pieces = []
            for t, (_, _, dp) in enumerate(TAPS):
                if t == CENTER:
                    pieces.append(x)           # centre tap: no roll, mask is all-ones
                else:
                    pieces.append(shift(x, dp) * masks_ref[t:t + 1, :])
            xcol = jnp.concatenate(pieces, axis=0)                       # (9*cin, P)
            h1 = jnp.dot(w1, xcol, preferred_element_type=jnp.float32)   # (cout, P)

            # ---- BN1 (folded) + ReLU ----
            h1 = jnp.maximum(h1 * pc[:, 9:10] + pc[:, 10:11], 0.0)

            # ---- conv2 (3x3 depthwise): lane-roll MACs; init with the centre tap ----
            acc = h1 * pc[:, CENTER:CENTER + 1]
            for t, (_, _, dp) in enumerate(TAPS):
                if t == CENTER:
                    continue
                acc = acc + (shift(h1, dp) * masks_ref[t:t + 1, :]) * pc[:, t:t + 1]

            # ---- BN2 (folded) ----
            y = acc * pc[:, 11:12] + pc[:, 12:13]

            # ---- skip connection ----
            if use_proj:
                # 1x1 conv + BN3; cin is tiny so stay on the VPU (broadcast MACs).
                sk = w3[:, 0:1] * x[0:1, :]
                for ci in range(1, cin):
                    sk = sk + w3[:, ci:ci + 1] * x[ci:ci + 1, :]
                y = y + (sk * pc[:, 13:14] + pc[:, 14:15])
            else:
                y = y + x                      # cin == cout: identity skip

            # ---- Dropout2d (eval => identity) + ReLU; lane-dense (cout, P) store ----
            o_ref[b] = jnp.maximum(y, 0.0).astype(o_ref.dtype)

    return kernel


def skip_conn_block(x_nchw, params, cin, cout, *, b_tile=1):
    """Fused SkipConnBlock forward (eval). x_nchw: (N, Cin, H, W) f32 -> (N, Cout, H, W)."""
    N, C, H, W = x_nchw.shape
    assert C == cin and N % b_tile == 0
    use_proj = (cin != cout)
    HW = H * W
    n_pc = 15 if use_proj else 13

    # NCHW is already contiguous as (N, C, H*W): free reshape, no transpose, no HBM pass.
    x_flat = x_nchw.reshape(N, cin, HW)

    # Static border-validity masks, one (H*W,) row per tap, computed once (tiny).
    hh = jnp.arange(HW, dtype=jnp.int32) // W
    ww = jnp.arange(HW, dtype=jnp.int32) % W
    mask_rows = []
    for dy in (-1, 0, 1):
        for dx in (-1, 0, 1):
            valid = (hh + dy >= 0) & (hh + dy < H) & (ww + dx >= 0) & (ww + dx < W)
            mask_rows.append(valid.astype(jnp.float32))
    masks = jnp.stack(mask_rows, axis=0)                                 # (9, HW)

    # conv1 weight as one im2col matrix (Cout, 9*Cin); column index = tap*Cin + ci,
    # tap = (dy+1)*3 + (dx+1)  (matches TAPS ordering in the kernel).
    w1_mat = jnp.transpose(params["w1"].reshape(9, cin, cout), (2, 0, 1)).reshape(cout, 9 * cin)

    # Packed per-channel params: columns [w2 taps(9) | s1 b1 s2 b2 (| s3 b3)].
    pc_cols = [jnp.transpose(params["w2"].reshape(9, cout)),
               params["s1"][:, None], params["b1"][:, None],
               params["s2"][:, None], params["b2"][:, None]]
    if use_proj:
        pc_cols += [params["s3"][:, None], params["b3"][:, None]]
    pc = jnp.concatenate(pc_cols, axis=1)                                # (cout, 13|15)

    inputs = [x_flat, w1_mat, pc, masks]
    in_specs = [
        pl.BlockSpec((b_tile, cin, HW), lambda b: (b, 0, 0)),   # activations (lane-dense)
        pl.BlockSpec((cout, 9 * cin), lambda b: (0, 0)),        # im2col weights (resident)
        pl.BlockSpec((cout, n_pc), lambda b: (0, 0)),           # packed per-channel params
        pl.BlockSpec((9, HW), lambda b: (0, 0)),                # precomputed border masks
    ]
    if use_proj:
        inputs.append(jnp.transpose(params["w3"].reshape(cin, cout)))    # (cout, cin)
        in_specs.append(pl.BlockSpec((cout, cin), lambda b: (0, 0)))

    # Advisory cost so XLA can overlap this custom call with neighbouring ops.
    flops = int(2 * 9 * cin * cout * N * HW + 30 * cout * N * HW)
    bytes_accessed = int(4 * ((cin + cout) * N * HW + 9 * HW
                              + cout * (9 * cin + n_pc + (cin if use_proj else 0))))
    cost = pl.CostEstimate(flops=flops, transcendentals=0, bytes_accessed=bytes_accessed)

    out_flat = pl.pallas_call(
        _make_kernel(H, W, cin, cout, b_tile, use_proj),
        out_shape=jax.ShapeDtypeStruct((N, cout, HW), jnp.float32),
        grid_spec=pltpu.PrefetchScalarGridSpec(
            num_scalar_prefetch=0,
            grid=(N // b_tile,),              # keep >= 2 steps so both v7x TCs get work
            in_specs=in_specs,
            out_specs=pl.BlockSpec((b_tile, cout, HW), lambda b: (b, 0, 0)),
        ),
        compiler_params=pltpu.CompilerParams(dimension_semantics=("parallel",)),
        cost_estimate=cost,
        # Per-step VMEM ~ 4*(2*(cin+cout)*b_tile*HW + 9*HW) bytes of double-buffered I/O
        # plus a handful of (cout, b_tile*HW) working values; raise b_tile freely but
        # budget against v7x's 32 MiB scoped / 64 MiB physical VMEM (set vmem_limit_bytes
        # explicitly only if you exceed the default scoped limit).
    )(*inputs)

    # (N, Cout, H*W) -> NCHW is again a free reshape (no transpose).
    return out_flat.reshape(N, cout, H, W)


def make_params(key, cin, cout):
    """Deterministic synthetic parameters. BN (eval) is folded to per-channel scale/bias."""
    ks = jax.random.split(key, 12)
    eps = 1e-5

    def bn_fold(kg, kb, km, kv):
        gamma = 1.0 + 0.1 * jax.random.normal(kg, (cout,), jnp.float32)
        beta = 0.1 * jax.random.normal(kb, (cout,), jnp.float32)
        mean = 0.05 * jax.random.normal(km, (cout,), jnp.float32)
        var = 1.0 + 0.1 * jax.random.uniform(kv, (cout,), jnp.float32)
        scale = gamma / jnp.sqrt(var + eps)
        bias = beta - mean * scale
        return scale, bias

    w1 = 0.2 * jax.random.normal(ks[0], (3, 3, cin, cout), jnp.float32)   # HWIO
    w2 = 0.2 * jax.random.normal(ks[1], (3, 3, 1, cout), jnp.float32)     # HWIO depthwise
    w3 = 0.2 * jax.random.normal(ks[2], (1, 1, cin, cout), jnp.float32)   # HWIO 1x1
    s1, b1 = bn_fold(ks[3], ks[4], ks[5], ks[6])
    s2, b2 = bn_fold(ks[7], ks[8], ks[9], ks[10])
    s3, b3 = bn_fold(ks[11], ks[4], ks[7], ks[2])
    return dict(w1=w1, w2=w2, w3=w3, s1=s1, b1=b1, s2=s2, b2=b2, s3=s3, b3=b3)


def ref_forward(x_nchw, params, cin, cout):
    """Pure-JAX (XLA conv) reference for correctness checking."""
    x = jnp.transpose(x_nchw, (0, 2, 3, 1))  # NHWC
    dn = ("NHWC", "HWIO", "NHWC")
    og = x
    h = lax.conv_general_dilated(x, params["w1"], (1, 1), "SAME", dimension_numbers=dn)
    h = h * params["s1"] + params["b1"]
    h = jnp.maximum(h, 0.0)
    y = lax.conv_general_dilated(h, params["w2"], (1, 1), "SAME",
                                 dimension_numbers=dn, feature_group_count=cout)
    y = y * params["s2"] + params["b2"]
    if cin == cout:
        y = y + og
    else:
        sk = lax.conv_general_dilated(og, params["w3"], (1, 1), "SAME", dimension_numbers=dn)
        sk = sk * params["s3"] + params["b3"]
        y = y + sk
    y = jnp.maximum(y, 0.0)
    return jnp.transpose(y, (0, 3, 1, 2))


if __name__ == "__main__":
    key = jax.random.PRNGKey(0)
    kx, kp = jax.random.split(key)

    # projection-skip branch (cin != cout): N=2, b_tile=1 -> grid=(2,) "parallel"
    N, cin, cout, H, W = 2, 4, 8, 16, 16
    x = jax.random.normal(kx, (N, cin, H, W), jnp.float32)
    params = make_params(kp, cin, cout)
    out = jax.block_until_ready(skip_conn_block(x, params, cin, cout, b_tile=1))
    ref = jax.block_until_ready(ref_forward(x, params, cin, cout))
    assert out.shape == (N, cout, H, W)
    assert jnp.allclose(out, ref, rtol=5e-4, atol=5e-4), "mismatch vs reference (projection skip)"

    # identity-skip branch (cin == cout): N=4, b_tile=2 -> grid stays (2,) with 2 images/step
    N2 = 4
    x_eq = jax.random.normal(kx, (N2, cout, H, W), jnp.float32)
    params_eq = make_params(kp, cout, cout)
    out_eq = jax.block_until_ready(skip_conn_block(x_eq, params_eq, cout, cout, b_tile=2))
    ref_eq = jax.block_until_ready(ref_forward(x_eq, params_eq, cout, cout))
    assert out_eq.shape == (N2, cout, H, W)
    assert jnp.allclose(out_eq, ref_eq, rtol=5e-4, atol=5e-4), "mismatch vs reference (identity skip)"

    print("KERNEL_OK")
</pallas_src>

<mosaic_0001>
module attributes {stable_mosaic.version = 11 : i64} {
  func.func @kernel(%arg0: i32, %arg1: memref<1x4x256xf32, #tpu.memory_space<vmem>>, %arg2: memref<8x36xf32, #tpu.memory_space<vmem>>, %arg3: memref<8x15xf32, #tpu.memory_space<vmem>>, %arg4: memref<9x256xf32, #tpu.memory_space<vmem>>, %arg5: memref<8x4xf32, #tpu.memory_space<vmem>>, %arg6: memref<1x8x256xf32, #tpu.memory_space<vmem>>) attributes {dimension_semantics = [#tpu.dimension_semantics<parallel>], iteration_bounds = array<i64: 2>, scalar_prefetch = 0 : i64, scratch_operands = 0 : i64, tpu.core_type = #tpu.core_type<tc>, window_params = [{transform_indices = @transform_0, window_bounds = array<i64: 1, 4, 256>}, {pipeline_mode = #tpu.pipeline_mode<synchronous>, transform_indices = @transform_1, window_bounds = array<i64: 8, 36>}, {pipeline_mode = #tpu.pipeline_mode<synchronous>, transform_indices = @transform_2, window_bounds = array<i64: 8, 15>}, {pipeline_mode = #tpu.pipeline_mode<synchronous>, transform_indices = @transform_3, window_bounds = array<i64: 9, 256>}, {pipeline_mode = #tpu.pipeline_mode<synchronous>, transform_indices = @transform_4, window_bounds = array<i64: 8, 4>}, {transform_indices = @transform_5, window_bounds = array<i64: 1, 8, 256>}]} {
    %c0 = arith.constant 0 : index
    %c0_0 = arith.constant 0 : index
    %0 = vector.load %arg2[%c0, %c0_0] : memref<8x36xf32, #tpu.memory_space<vmem>>, vector<8x36xf32>
    %c0_1 = arith.constant 0 : index
    %c0_2 = arith.constant 0 : index
    %1 = vector.load %arg3[%c0_1, %c0_2] : memref<8x15xf32, #tpu.memory_space<vmem>>, vector<8x15xf32>
    %c0_3 = arith.constant 0 : index
    %c0_4 = arith.constant 0 : index
    %2 = vector.load %arg5[%c0_3, %c0_4] : memref<8x4xf32, #tpu.memory_space<vmem>>, vector<8x4xf32>
    %c0_5 = arith.constant 0 : index
    %c0_6 = arith.constant 0 : index
    %c0_7 = arith.constant 0 : index
    %3 = vector.load %arg1[%c0_5, %c0_6, %c0_7] : memref<1x4x256xf32, #tpu.memory_space<vmem>>, vector<1x4x256xf32>
    %4 = vector.shape_cast %3 : vector<1x4x256xf32> to vector<4x256xf32>
    %c17_i32 = arith.constant 17 : i32
    %5 = tpu.dynamic_rotate %4 by %c17_i32 dim 1 : vector<4x256xf32>, i32 -> vector<4x256xf32>
    %c0_8 = arith.constant 0 : index
    %c0_9 = arith.constant 0 : index
    %6 = vector.load %arg4[%c0_8, %c0_9] : memref<9x256xf32, #tpu.memory_space<vmem>>, vector<1x256xf32>
    %7 = vector.broadcast %6 : vector<1x256xf32> to vector<4x256xf32>
    %8 = arith.mulf %5, %7 : vector<4x256xf32>
    %c16_i32 = arith.constant 16 : i32
    %9 = tpu.dynamic_rotate %4 by %c16_i32 dim 1 : vector<4x256xf32>, i32 -> vector<4x256xf32>
    %c1 = arith.constant 1 : index
    %c0_10 = arith.constant 0 : index
    %10 = vector.load %arg4[%c1, %c0_10] : memref<9x256xf32, #tpu.memory_space<vmem>>, vector<1x256xf32>
    %11 = vector.broadcast %10 : vector<1x256xf32> to vector<4x256xf32>
    %12 = arith.mulf %9, %11 : vector<4x256xf32>
    %c15_i32 = arith.constant 15 : i32
    %13 = tpu.dynamic_rotate %4 by %c15_i32 dim 1 : vector<4x256xf32>, i32 -> vector<4x256xf32>
    %c2 = arith.constant 2 : index
    %c0_11 = arith.constant 0 : index
    %14 = vector.load %arg4[%c2, %c0_11] : memref<9x256xf32, #tpu.memory_space<vmem>>, vector<1x256xf32>
    %15 = vector.broadcast %14 : vector<1x256xf32> to vector<4x256xf32>
    %16 = arith.mulf %13, %15 : vector<4x256xf32>
    %c1_i32 = arith.constant 1 : i32
    %17 = tpu.dynamic_rotate %4 by %c1_i32 dim 1 : vector<4x256xf32>, i32 -> vector<4x256xf32>
    %c3 = arith.constant 3 : index
    %c0_12 = arith.constant 0 : index
    %18 = vector.load %arg4[%c3, %c0_12] : memref<9x256xf32, #tpu.memory_space<vmem>>, vector<1x256xf32>
    %19 = vector.broadcast %18 : vector<1x256xf32> to vector<4x256xf32>
    %20 = arith.mulf %17, %19 : vector<4x256xf32>
    %c255_i32 = arith.constant 255 : i32
    %21 = tpu.dynamic_rotate %4 by %c255_i32 dim 1 : vector<4x256xf32>, i32 -> vector<4x256xf32>
    %c5 = arith.constant 5 : index
    %c0_13 = arith.constant 0 : index
    %22 = vector.load %arg4[%c5, %c0_13] : memref<9x256xf32, #tpu.memory_space<vmem>>, vector<1x256xf32>
    %23 = vector.broadcast %22 : vector<1x256xf32> to vector<4x256xf32>
    %24 = arith.mulf %21, %23 : vector<4x256xf32>
    %c241_i32 = arith.constant 241 : i32
    %25 = tpu.dynamic_rotate %4 by %c241_i32 dim 1 : vector<4x256xf32>, i32 -> vector<4x256xf32>
    %c6 = arith.constant 6 : index
    %c0_14 = arith.constant 0 : index
    %26 = vector.load %arg4[%c6, %c0_14] : memref<9x256xf32, #tpu.memory_space<vmem>>, vector<1x256xf32>
    %27 = vector.broadcast %26 : vector<1x256xf32> to vector<4x256xf32>
    %28 = arith.mulf %25, %27 : vector<4x256xf32>
    %c240_i32 = arith.constant 240 : i32
    %29 = tpu.dynamic_rotate %4 by %c240_i32 dim 1 : vector<4x256xf32>, i32 -> vector<4x256xf32>
    %c7 = arith.constant 7 : index
    %c0_15 = arith.constant 0 : index
    %30 = vector.load %arg4[%c7, %c0_15] : memref<9x256xf32, #tpu.memory_space<vmem>>, vector<1x256xf32>
    %31 = vector.broadcast %30 : vector<1x256xf32> to vector<4x256xf32>
    %32 = arith.mulf %29, %31 : vector<4x256xf32>
    %c239_i32 = arith.constant 239 : i32
    %33 = tpu.dynamic_rotate %4 by %c239_i32 dim 1 : vector<4x256xf32>, i32 -> vector<4x256xf32>
    %c8 = arith.constant 8 : index
    %c0_16 = arith.constant 0 : index
    %34 = vector.load %arg4[%c8, %c0_16] : memref<9x256xf32, #tpu.memory_space<vmem>>, vector<1x256xf32>
    %35 = vector.broadcast %34 : vector<1x256xf32> to vector<4x256xf32>
    %36 = arith.mulf %33, %35 : vector<4x256xf32>
    %37 = tpu.concatenate %8, %12, %16, %20, %4, %24, %28, %32, %36 in 0 : vector<4x256xf32>, vector<4x256xf32>, vector<4x256xf32>, vector<4x256xf32>, vector<4x256xf32>, vector<4x256xf32>, vector<4x256xf32>, vector<4x256xf32>, vector<4x256xf32> -> vector<36x256xf32>
    %cst = arith.constant dense<0.000000e+00> : vector<8x256xf32>
    %38 = tpu.matmul %0, %37, %cst {dimension_numbers = #tpu.dot_dimension_numbers<[1], [0], [0], [1], [0, 0, 1, 1], [], []>} : vector<8x36xf32>, vector<36x256xf32>, vector<8x256xf32> -> vector<8x256xf32>
    %39 = vector.extract_strided_slice %1 {offsets = [0, 9], sizes = [8, 1], strides = [1, 1]} : vector<8x15xf32> to vector<8x1xf32>
    %40 = vector.broadcast %39 : vector<8x1xf32> to vector<8x256xf32>
    %41 = arith.mulf %38, %40 : vector<8x256xf32>
    %42 = vector.extract_strided_slice %1 {offsets = [0, 10], sizes = [8, 1], strides = [1, 1]} : vector<8x15xf32> to vector<8x1xf32>
    %43 = vector.broadcast %42 : vector<8x1xf32> to vector<8x256xf32>
    %44 = arith.addf %41, %43 : vector<8x256xf32>
    %cst_17 = arith.constant 0.000000e+00 : f32
    %45 = vector.broadcast %cst_17 : f32 to vector<8x256xf32>
    %46 = arith.maximumf %44, %45 : vector<8x256xf32>
    %47 = vector.extract_strided_slice %1 {offsets = [0, 4], sizes = [8, 1], strides = [1, 1]} : vector<8x15xf32> to vector<8x1xf32>
    %48 = vector.broadcast %47 : vector<8x1xf32> to vector<8x256xf32>
    %49 = arith.mulf %46, %48 : vector<8x256xf32>
    %c17_i32_18 = arith.constant 17 : i32
    %50 = tpu.dynamic_rotate %46 by %c17_i32_18 dim 1 : vector<8x256xf32>, i32 -> vector<8x256xf32>
    %c0_19 = arith.constant 0 : index
    %c0_20 = arith.constant 0 : index
    %51 = vector.load %arg4[%c0_19, %c0_20] : memref<9x256xf32, #tpu.memory_space<vmem>>, vector<1x256xf32>
    %52 = vector.broadcast %51 : vector<1x256xf32> to vector<8x256xf32>
    %53 = arith.mulf %50, %52 : vector<8x256xf32>
    %54 = vector.extract_strided_slice %1 {offsets = [0, 0], sizes = [8, 1], strides = [1, 1]} : vector<8x15xf32> to vector<8x1xf32>
    %55 = vector.broadcast %54 : vector<8x1xf32> to vector<8x256xf32>
    %56 = arith.mulf %53, %55 : vector<8x256xf32>
    %57 = arith.addf %49, %56 : vector<8x256xf32>
    %c16_i32_21 = arith.constant 16 : i32
    %58 = tpu.dynamic_rotate %46 by %c16_i32_21 dim 1 : vector<8x256xf32>, i32 -> vector<8x256xf32>
    %c1_22 = arith.constant 1 : index
    %c0_23 = arith.constant 0 : index
    %59 = vector.load %arg4[%c1_22, %c0_23] : memref<9x256xf32, #tpu.memory_space<vmem>>, vector<1x256xf32>
    %60 = vector.broadcast %59 : vector<1x256xf32> to vector<8x256xf32>
    %61 = arith.mulf %58, %60 : vector<8x256xf32>
    %62 = vector.extract_strided_slice %1 {offsets = [0, 1], sizes = [8, 1], strides = [1, 1]} : vector<8x15xf32> to vector<8x1xf32>
    %63 = vector.broadcast %62 : vector<8x1xf32> to vector<8x256xf32>
    %64 = arith.mulf %61, %63 : vector<8x256xf32>
    %65 = arith.addf %57, %64 : vector<8x256xf32>
    %c15_i32_24 = arith.constant 15 : i32
    %66 = tpu.dynamic_rotate %46 by %c15_i32_24 dim 1 : vector<8x256xf32>, i32 -> vector<8x256xf32>
    %c2_25 = arith.constant 2 : index
    %c0_26 = arith.constant 0 : index
    %67 = vector.load %arg4[%c2_25, %c0_26] : memref<9x256xf32, #tpu.memory_space<vmem>>, vector<1x256xf32>
    %68 = vector.broadcast %67 : vector<1x256xf32> to vector<8x256xf32>
    %69 = arith.mulf %66, %68 : vector<8x256xf32>
    %70 = vector.extract_strided_slice %1 {offsets = [0, 2], sizes = [8, 1], strides = [1, 1]} : vector<8x15xf32> to vector<8x1xf32>
    %71 = vector.broadcast %70 : vector<8x1xf32> to vector<8x256xf32>
    %72 = arith.mulf %69, %71 : vector<8x256xf32>
    %73 = arith.addf %65, %72 : vector<8x256xf32>
    %c1_i32_27 = arith.constant 1 : i32
    %74 = tpu.dynamic_rotate %46 by %c1_i32_27 dim 1 : vector<8x256xf32>, i32 -> vector<8x256xf32>
    %c3_28 = arith.constant 3 : index
    %c0_29 = arith.constant 0 : index
    %75 = vector.load %arg4[%c3_28, %c0_29] : memref<9x256xf32, #tpu.memory_space<vmem>>, vector<1x256xf32>
    %76 = vector.broadcast %75 : vector<1x256xf32> to vector<8x256xf32>
    %77 = arith.mulf %74, %76 : vector<8x256xf32>
    %78 = vector.extract_strided_slice %1 {offsets = [0, 3], sizes = [8, 1], strides = [1, 1]} : vector<8x15xf32> to vector<8x1xf32>
    %79 = vector.broadcast %78 : vector<8x1xf32> to vector<8x256xf32>
    %80 = arith.mulf %77, %79 : vector<8x256xf32>
    %81 = arith.addf %73, %80 : vector<8x256xf32>
    %c255_i32_30 = arith.constant 255 : i32
    %82 = tpu.dynamic_rotate %46 by %c255_i32_30 dim 1 : vector<8x256xf32>, i32 -> vector<8x256xf32>
    %c5_31 = arith.constant 5 : index
    %c0_32 = arith.constant 0 : index
    %83 = vector.load %arg4[%c5_31, %c0_32] : memref<9x256xf32, #tpu.memory_space<vmem>>, vector<1x256xf32>
    %84 = vector.broadcast %83 : vector<1x256xf32> to vector<8x256xf32>
    %85 = arith.mulf %82, %84 : vector<8x256xf32>
    %86 = vector.extract_strided_slice %1 {offsets = [0, 5], sizes = [8, 1], strides = [1, 1]} : vector<8x15xf32> to vector<8x1xf32>
    %87 = vector.broadcast %86 : vector<8x1xf32> to vector<8x256xf32>
    %88 = arith.mulf %85, %87 : vector<8x256xf32>
    %89 = arith.addf %81, %88 : vector<8x256xf32>
    %c241_i32_33 = arith.constant 241 : i32
    %90 = tpu.dynamic_rotate %46 by %c241_i32_33 dim 1 : vector<8x256xf32>, i32 -> vector<8x256xf32>
    %c6_34 = arith.constant 6 : index
    %c0_35 = arith.constant 0 : index
    %91 = vector.load %arg4[%c6_34, %c0_35] : memref<9x256xf32, #tpu.memory_space<vmem>>, vector<1x256xf32>
    %92 = vector.broadcast %91 : vector<1x256xf32> to vector<8x256xf32>
    %93 = arith.mulf %90, %92 : vector<8x256xf32>
    %94 = vector.extract_strided_slice %1 {offsets = [0, 6], sizes = [8, 1], strides = [1, 1]} : vector<8x15xf32> to vector<8x1xf32>
    %95 = vector.broadcast %94 : vector<8x1xf32> to vector<8x256xf32>
    %96 = arith.mulf %93, %95 : vector<8x256xf32>
    %97 = arith.addf %89, %96 : vector<8x256xf32>
    %c240_i32_36 = arith.constant 240 : i32
    %98 = tpu.dynamic_rotate %46 by %c240_i32_36 dim 1 : vector<8x256xf32>, i32 -> vector<8x256xf32>
    %c7_37 = arith.constant 7 : index
    %c0_38 = arith.constant 0 : index
    %99 = vector.load %arg4[%c7_37, %c0_38] : memref<9x256xf32, #tpu.memory_space<vmem>>, vector<1x256xf32>
    %100 = vector.broadcast %99 : vector<1x256xf32> to vector<8x256xf32>
    %101 = arith.mulf %98, %100 : vector<8x256xf32>
    %102 = vector.extract_strided_slice %1 {offsets = [0, 7], sizes = [8, 1], strides = [1, 1]} : vector<8x15xf32> to vector<8x1xf32>
    %103 = vector.broadcast %102 : vector<8x1xf32> to vector<8x256xf32>
    %104 = arith.mulf %101, %103 : vector<8x256xf32>
    %105 = arith.addf %97, %104 : vector<8x256xf32>
    %c239_i32_39 = arith.constant 239 : i32
    %106 = tpu.dynamic_rotate %46 by %c239_i32_39 dim 1 : vector<8x256xf32>, i32 -> vector<8x256xf32>
    %c8_40 = arith.constant 8 : index
    %c0_41 = arith.constant 0 : index
    %107 = vector.load %arg4[%c8_40, %c0_41] : memref<9x256xf32, #tpu.memory_space<vmem>>, vector<1x256xf32>
    %108 = vector.broadcast %107 : vector<1x256xf32> to vector<8x256xf32>
    %109 = arith.mulf %106, %108 : vector<8x256xf32>
    %110 = vector.extract_strided_slice %1 {offsets = [0, 8], sizes = [8, 1], strides = [1, 1]} : vector<8x15xf32> to vector<8x1xf32>
    %111 = vector.broadcast %110 : vector<8x1xf32> to vector<8x256xf32>
    %112 = arith.mulf %109, %111 : vector<8x256xf32>
    %113 = arith.addf %105, %112 : vector<8x256xf32>
    %114 = vector.extract_strided_slice %1 {offsets = [0, 11], sizes = [8, 1], strides = [1, 1]} : vector<8x15xf32> to vector<8x1xf32>
    %115 = vector.broadcast %114 : vector<8x1xf32> to vector<8x256xf32>
    %116 = arith.mulf %113, %115 : vector<8x256xf32>
    %117 = vector.extract_strided_slice %1 {offsets = [0, 12], sizes = [8, 1], strides = [1, 1]} : vector<8x15xf32> to vector<8x1xf32>
    %118 = vector.broadcast %117 : vector<8x1xf32> to vector<8x256xf32>
    %119 = arith.addf %116, %118 : vector<8x256xf32>
    %120 = vector.extract_strided_slice %2 {offsets = [0, 0], sizes = [8, 1], strides = [1, 1]} : vector<8x4xf32> to vector<8x1xf32>
    %121 = vector.extract_strided_slice %4 {offsets = [0, 0], sizes = [1, 256], strides = [1, 1]} : vector<4x256xf32> to vector<1x256xf32>
    %122 = vector.broadcast %120 : vector<8x1xf32> to vector<8x256xf32>
    %123 = vector.broadcast %121 : vector<1x256xf32> to vector<8x256xf32>
    %124 = arith.mulf %122, %123 : vector<8x256xf32>
    %125 = vector.extract_strided_slice %2 {offsets = [0, 1], sizes = [8, 1], strides = [1, 1]} : vector<8x4xf32> to vector<8x1xf32>
    %126 = vector.extract_strided_slice %4 {offsets = [1, 0], sizes = [1, 256], strides = [1, 1]} : vector<4x256xf32> to vector<1x256xf32>
    %127 = vector.broadcast %125 : vector<8x1xf32> to vector<8x256xf32>
    %128 = vector.broadcast %126 : vector<1x256xf32> to vector<8x256xf32>
    %129 = arith.mulf %127, %128 : vector<8x256xf32>
    %130 = arith.addf %124, %129 : vector<8x256xf32>
    %131 = vector.extract_strided_slice %2 {offsets = [0, 2], sizes = [8, 1], strides = [1, 1]} : vector<8x4xf32> to vector<8x1xf32>
    %132 = vector.extract_strided_slice %4 {offsets = [2, 0], sizes = [1, 256], strides = [1, 1]} : vector<4x256xf32> to vector<1x256xf32>
    %133 = vector.broadcast %131 : vector<8x1xf32> to vector<8x256xf32>
    %134 = vector.broadcast %132 : vector<1x256xf32> to vector<8x256xf32>
    %135 = arith.mulf %133, %134 : vector<8x256xf32>
    %136 = arith.addf %130, %135 : vector<8x256xf32>
    %137 = vector.extract_strided_slice %2 {offsets = [0, 3], sizes = [8, 1], strides = [1, 1]} : vector<8x4xf32> to vector<8x1xf32>
    %138 = vector.extract_strided_slice %4 {offsets = [3, 0], sizes = [1, 256], strides = [1, 1]} : vector<4x256xf32> to vector<1x256xf32>
    %139 = vector.broadcast %137 : vector<8x1xf32> to vector<8x256xf32>
    %140 = vector.broadcast %138 : vector<1x256xf32> to vector<8x256xf32>
    %141 = arith.mulf %139, %140 : vector<8x256xf32>
    %142 = arith.addf %136, %141 : vector<8x256xf32>
    %143 = vector.extract_strided_slice %1 {offsets = [0, 13], sizes = [8, 1], strides = [1, 1]} : vector<8x15xf32> to vector<8x1xf32>
    %144 = vector.broadcast %143 : vector<8x1xf32> to vector<8x256xf32>
    %145 = arith.mulf %142, %144 : vector<8x256xf32>
    %146 = vector.extract_strided_slice %1 {offsets = [0, 14], sizes = [8, 1], strides = [1, 1]} : vector<8x15xf32> to vector<8x1xf32>
    %147 = vector.broadcast %146 : vector<8x1xf32> to vector<8x256xf32>
    %148 = arith.addf %145, %147 : vector<8x256xf32>
    %149 = arith.addf %119, %148 : vector<8x256xf32>
    %cst_42 = arith.constant 0.000000e+00 : f32
    %150 = vector.broadcast %cst_42 : f32 to vector<8x256xf32>
    %151 = arith.maximumf %149, %150 : vector<8x256xf32>
    %c0_43 = arith.constant 0 : index
    %c0_44 = arith.constant 0 : index
    %c0_45 = arith.constant 0 : index
    %152 = vector.load %arg6[%c0_43, %c0_44, %c0_45] : memref<1x8x256xf32, #tpu.memory_space<vmem>>, vector<1x8x256xf32>
    %153 = vector.shape_cast %152 : vector<1x8x256xf32> to vector<8x256xf32>
    %154 = vector.shape_cast %151 : vector<8x256xf32> to vector<1x8x256xf32>
    tpu.vector_store %arg6[%c0_43, %c0_44, %c0_45], %154 {strides = array<i32>} : memref<1x8x256xf32, #tpu.memory_space<vmem>>, vector<1x8x256xf32>,
    return
  }
  func.func @transform_0(%arg0: i32) -> (i32, i32, i32) {
    %c0_i32 = arith.constant 0 : i32
    %c0_i32_0 = arith.constant 0 : i32
    %c0_i32_1 = arith.constant 0 : i32
    return %arg0, %c0_i32, %c0_i32_0 : i32, i32, i32
  }
  func.func @transform_1(%arg0: i32) -> (i32, i32) {
    %c0_i32 = arith.constant 0 : i32
    %c0_i32_0 = arith.constant 0 : i32
    %c0_i32_1 = arith.constant 0 : i32
    return %c0_i32, %c0_i32_0 : i32, i32
  }
  func.func @transform_2(%arg0: i32) -> (i32, i32) {
    %c0_i32 = arith.constant 0 : i32
    %c0_i32_0 = arith.constant 0 : i32
    %c0_i32_1 = arith.constant 0 : i32
    return %c0_i32, %c0_i32_0 : i32, i32
  }
  func.func @transform_3(%arg0: i32) -> (i32, i32) {
    %c0_i32 = arith.constant 0 : i32
    %c0_i32_0 = arith.constant 0 : i32
    %c0_i32_1 = arith.constant 0 : i32
    return %c0_i32, %c0_i32_0 : i32, i32
  }
  func.func @transform_4(%arg0: i32) -> (i32, i32) {
    %c0_i32 = arith.constant 0 : i32
    %c0_i32_0 = arith.constant 0 : i32
    %c0_i32_1 = arith.constant 0 : i32
    return %c0_i32, %c0_i32_0 : i32, i32
  }
  func.func @transform_5(%arg0: i32) -> (i32, i32, i32) {
    %c0_i32 = arith.constant 0 : i32
    %c0_i32_0 = arith.constant 0 : i32
    %c0_i32_1 = arith.constant 0 : i32
    return %arg0, %c0_i32, %c0_i32_0 : i32, i32, i32
  }
}

</mosaic_0001>

<llo_original>
// kernel: tpu_custom_call.1
$region0: #{tpu_custom_call.1}
  #allocation0 [shape = 'u32[]', space=smem, size = 0x4, offset = 0x4, fixed_abs, tag = 'smem constant byte address 0x4 - core index']
  #allocation1 [shape = 'u32[144,128]{1,0:T(1,128)}', space=vmem, size = 0x12000, scoped, tag = 'internal scratch']
  %s0 = inlined_call_operand.hbm [shape: f32[2,4,256], index: 0, kind: input, shape index: {}]
  %s1 = inlined_call_operand.vmem [shape: f32[8,36], index: 1, kind: input, shape index: {}]
  %s2 = inlined_call_operand.hbm [shape: f32[8,15], index: 2, kind: input, shape index: {}]
  %s3 = inlined_call_operand.hbm [shape: f32[9,256], index: 3, kind: input, shape index: {}]
  %s4 = inlined_call_operand.vmem [shape: f32[8,4], index: 4, kind: input, shape index: {}]
  %s5 = inlined_call_operand.hbm [shape: f32[2,8,256], index: 5, kind: output, shape index: {}]
  %s6 = sld [smem:[#allocation0]]
  $region65: #{tpu_custom_call.1} parent=0
    _
  %s8 = ssub.s32 1, %s6
  %s9 = scalar_select 0, %s8, %s6
  $region1: #{tpu_custom_call.1} parent=0
    #allocation2 [shape = 'u8[8192]{0}', space=vmem, size = 0x2000, scoped, tag = 'input window, operand 0']
    #allocation3 [shape = 's32[2]{0}', space=sflag, size = 0x8, scoped, tag = 'scoped memory for tpu_custom_call.1']
    #allocation4 [shape = 's32[2]{0}', space=sflag, size = 0x8, scoped, tag = 'scoped memory for tpu_custom_call.1']
    #allocation5 [shape = 'u8[4096]{0}', space=vmem, size = 0x1000, scoped, tag = 'input window, operand 2, single buffered']
    #allocation6 [shape = 's32[1]{0}', space=sflag, size = 0x4, scoped, tag = 'scoped memory for tpu_custom_call.1']
    #allocation7 [shape = 'u8[16384]{0}', space=vmem, size = 0x4000, scoped, tag = 'input window, operand 3, single buffered']
    #allocation8 [shape = 'u8[16384]{0}', space=vmem, size = 0x4000, scoped, tag = 'output window, operand 0']
    %10 = vsyncpa [#allocation3], 0
    %s11 = scalar_lea.sflag [#allocation3], 1
    %12 = vsyncpa %s11, 0
    %13 = vsyncpa [#allocation6], 0
    %14 = vsyncpa [#allocation4], 0
    %s15 = scalar_lea.sflag [#allocation4], 1
    %16 = vsyncpa %s15, 0
    loop: start=0, step=1, limit=4
    $region2: #{tpu_custom_call.1} parent=1 // loop_pre_header
      _
    $region3: #{tpu_custom_call.1} parent=1 // loop_header
      %s18 = sphi 0, %s22
      %p19 = scmp.ge.s32.totalorder %s18, 4
      %s28 = sphi 0, %s30
      %s31 = sphi 0, %s28
      %s32 = sphi 0, %s31
      %s48 = sphi 0, %s32
      %s52 = sphi 0, %s52
      %s54 = sphi 0, %s52
      %s55 = sphi 0, %s54
      %s69 = sphi 0, %s55
      %s73 = sphi 0, %s73
      %s75 = sphi 0, %s73
      %s76 = sphi 0, %s75
      %s90 = sphi 0, %s76
      %s94 = sphi 0, %s94
      %s96 = sphi 0, %s94
      %s97 = sphi 0, %s96
      %s111 = sphi 0, %s97
      %s115 = sphi 0, %s115
      %s117 = sphi 0, %s115
      %s118 = sphi 0, %s117
      %s132 = sphi 0, %s118
      %s138 = sphi 0, %s140
      %s141 = sphi 0, %s138
      %s142 = sphi 0, %s141
      %s158 = sphi 0, %s142
    $region4: #{tpu_custom_call.1} parent=1 // loop_header_branch
      %21 = sbr.rel (%p19) target = $region8
    $region5: #{tpu_custom_call.1} parent=1 // loop_body
      %s23 = ssub.s32 %s18, 1
      %s24 = ssub.s32 %s18, 2
      %s25 = sadd.s32 %s18, 1
      %s26 = ssub.s32 %s18, %s25
      %p27 = scmp.eq.s32.totalorder %s26, 0
      %s29 = sadd.s32 %s28, 1
      %s30 = scalar_select %p27, %s28, %s29
      %p33 = pneg %p27
      %p34 = scmp.eq.s32.totalorder %s18, 1
      %p35 = por %p33, %p34
      %p36 = scmp.ne.s32.totalorder %s28, %s31
      %p37 = scmp.eq.s32.totalorder %s18, 0
      %p38 = por %p36, %p37
      %p39 = scmp.ne.s32.totalorder %s28, %s31
      %p40 = scmp.eq.s32.totalorder %s23, 1
      %p41 = por %p39, %p40
      %p42 = scmp.ne.s32.totalorder %s31, %s32
      %p43 = scmp.eq.s32.totalorder %s23, 0
      %p44 = por %p42, %p43
      %p45 = scmp.ne.s32.totalorder %s31, %s32
      %p46 = scmp.eq.s32.totalorder %s24, 1
      %p47 = por %p45, %p46
      %p49 = scmp.ne.s32.totalorder %s32, %s48
      %p50 = scmp.eq.s32.totalorder %s24, 0
      %p51 = por %p49, %p50
      %s53 = sadd.s32 %s52, 1
      %p56 = scmp.eq.s32.totalorder %s18, 1
      %p57 = scmp.ne.s32.totalorder %s52, %s54
      %p58 = scmp.eq.s32.totalorder %s18, 0
      %p59 = por %p57, %p58
      %p60 = scmp.ne.s32.totalorder %s52, %s54
      %p61 = scmp.eq.s32.totalorder %s23, 1
      %p62 = por %p60, %p61
      %p63 = scmp.ne.s32.totalorder %s54, %s55
      %p64 = scmp.eq.s32.totalorder %s23, 0
      %p65 = por %p63, %p64
      %p66 = scmp.ne.s32.totalorder %s54, %s55
      %p67 = scmp.eq.s32.totalorder %s24, 1
      %p68 = por %p66, %p67
      %p70 = scmp.ne.s32.totalorder %s55, %s69
      %p71 = scmp.eq.s32.totalorder %s24, 0
      %p72 = por %p70, %p71
      %s74 = sadd.s32 %s73, 1
      %p77 = scmp.eq.s32.totalorder %s18, 1
      %p78 = scmp.ne.s32.totalorder %s73, %s75
      %p79 = scmp.eq.s32.totalorder %s18, 0
      %p80 = por %p78, %p79
      %p81 = scmp.ne.s32.totalorder %s73, %s75
      %p82 = scmp.eq.s32.totalorder %s23, 1
      %p83 = por %p81, %p82
      %p84 = scmp.ne.s32.totalorder %s75, %s76
      %p85 = scmp.eq.s32.totalorder %s23, 0
      %p86 = por %p84, %p85
      %p87 = scmp.ne.s32.totalorder %s75, %s76
      %p88 = scmp.eq.s32.totalorder %s24, 1
      %p89 = por %p87, %p88
      %p91 = scmp.ne.s32.totalorder %s76, %s90
      %p92 = scmp.eq.s32.totalorder %s24, 0
      %p93 = por %p91, %p92
      %s95 = sadd.s32 %s94, 1
      %p98 = scmp.eq.s32.totalorder %s18, 1
      %p99 = scmp.ne.s32.totalorder %s94, %s96
      %p100 = scmp.eq.s32.totalorder %s18, 0
      %p101 = por %p99, %p100
      %p102 = scmp.ne.s32.totalorder %s94, %s96
      %p103 = scmp.eq.s32.totalorder %s23, 1
      %p104 = por %p102, %p103
      %p105 = scmp.ne.s32.totalorder %s96, %s97
      %p106 = scmp.eq.s32.totalorder %s23, 0
      %p107 = por %p105, %p106
      %p108 = scmp.ne.s32.totalorder %s96, %s97
      %p109 = scmp.eq.s32.totalorder %s24, 1
      %p110 = por %p108, %p109
      %p112 = scmp.ne.s32.totalorder %s97, %s111
      %p113 = scmp.eq.s32.totalorder %s24, 0
      %p114 = por %p112, %p113
      %s116 = sadd.s32 %s115, 1
      %p119 = scmp.eq.s32.totalorder %s18, 1
      %p120 = scmp.ne.s32.totalorder %s115, %s117
      %p121 = scmp.eq.s32.totalorder %s18, 0
      %p122 = por %p120, %p121
      %p123 = scmp.ne.s32.totalorder %s115, %s117
      %p124 = scmp.eq.s32.totalorder %s23, 1
      %p125 = por %p123, %p124
      %p126 = scmp.ne.s32.totalorder %s117, %s118
      %p127 = scmp.eq.s32.totalorder %s23, 0
      %p128 = por %p126, %p127
      %p129 = scmp.ne.s32.totalorder %s117, %s118
      %p130 = scmp.eq.s32.totalorder %s24, 1
      %p131 = por %p129, %p130
      %p133 = scmp.ne.s32.totalorder %s118, %s132
      %p134 = scmp.eq.s32.totalorder %s24, 0
      %p135 = por %p133, %p134
      %s136 = ssub.s32 %s18, %s25
      %p137 = scmp.eq.s32.totalorder %s136, 0
      %s139 = sadd.s32 %s138, 1
      %s140 = scalar_select %p137, %s138, %s139
      %p143 = pneg %p137
      %p144 = scmp.eq.s32.totalorder %s18, 1
      %p145 = por %p143, %p144
      %p146 = scmp.ne.s32.totalorder %s138, %s141
      %p147 = scmp.eq.s32.totalorder %s18, 0
      %p148 = por %p146, %p147
      %p149 = scmp.ne.s32.totalorder %s138, %s141
      %p150 = scmp.eq.s32.totalorder %s23, 1
      %p151 = por %p149, %p150
      %p152 = scmp.ne.s32.totalorder %s141, %s142
      %p153 = scmp.eq.s32.totalorder %s23, 0
      %p154 = por %p152, %p153
      %p155 = scmp.ne.s32.totalorder %s141, %s142
      %p156 = scmp.eq.s32.totalorder %s24, 1
      %p157 = por %p155, %p156
      %p159 = scmp.ne.s32.totalorder %s142, %s158
      %p160 = scmp.eq.s32.totalorder %s24, 0
      %p161 = por %p159, %p160
      %p162 = scmp.le.s32.totalorder 1, %s18
      %p163 = scmp.lt.s32.totalorder %s18, 3
      %p164 = pnand %p162, %p163
      %p165 = pneg %p164
      // Predicated region
      $region9: #{tpu_custom_call.1} parent=5 // pred_check
        _
      $region10: #{tpu_custom_call.1} parent=5 // pred_check_branch
        %167 = sbr.rel (%p164) target = $region12
      $region11: #{tpu_custom_call.1} parent=5 // pred_region
        %s168 = ssub.s32 %s18, 1
        // Predicated region
        $region13: #{tpu_custom_call.1} parent=11 // pred_check
          %p169 = pneg %p65
        $region14: #{tpu_custom_call.1} parent=11 // pred_check_branch
          %171 = sbr.rel (%p169) target = $region16
        $region15: #{tpu_custom_call.1} parent=11 // pred_region
          _
        $region16: #{tpu_custom_call.1} parent=11 // pred_fallthru
          _
        // Predicated region
        $region17: #{tpu_custom_call.1} parent=11 // pred_check
          %p172 = pneg %p86
        $region18: #{tpu_custom_call.1} parent=11 // pred_check_branch
          %174 = sbr.rel (%p172) target = $region20
        $region19: #{tpu_custom_call.1} parent=11 // pred_region
          %s176 = ssub.s32 128, 128
          %177 = vsyncadd [#allocation6], %s176
          %s179 = sshll.u32 [#allocation5], 4
          %s180 = int_to_ptr.vmem [resolvable:$true] %s179
          %182 = dma.hbm_to_vmem [thread:$0]  %s2, 128, %s180, [#allocation6]
        $region20: #{tpu_custom_call.1} parent=11 // pred_fallthru
          _
        // Predicated region
        $region21: #{tpu_custom_call.1} parent=11 // pred_check
          %p183 = pneg %p107
        $region22: #{tpu_custom_call.1} parent=11 // pred_check_branch
          %185 = sbr.rel (%p183) target = $region24
        $region23: #{tpu_custom_call.1} parent=11 // pred_region
          %s187 = ssub.s32 512, 512
          %188 = vsyncadd [#allocation6], %s187
          %s189 = sshll.u32 [#allocation7], 4
          %s190 = int_to_ptr.vmem [resolvable:$true] %s189
          %195 = dma.hbm_to_vmem [thread:$0]  %s3, 512, %s190, [#allocation6], 256, 256, 16
        $region24: #{tpu_custom_call.1} parent=11 // pred_fallthru
          _
        // Predicated region
        $region25: #{tpu_custom_call.1} parent=11 // pred_check
          %p196 = pneg %p128
        $region26: #{tpu_custom_call.1} parent=11 // pred_check_branch
          %198 = sbr.rel (%p196) target = $region28
        $region27: #{tpu_custom_call.1} parent=11 // pred_region
          _
        $region28: #{tpu_custom_call.1} parent=11 // pred_fallthru
          _
      $region12: #{tpu_custom_call.1} parent=5 // pred_fallthru
        _
      %p199 = scmp.lt.s32.totalorder %s18, 2
      // Predicated region
      $region29: #{tpu_custom_call.1} parent=5 // pred_check
        %p200 = pneg %p199
      $region30: #{tpu_custom_call.1} parent=5 // pred_check_branch
        %202 = sbr.rel (%p200) target = $region32
      $region31: #{tpu_custom_call.1} parent=5 // pred_region
        // Predicated region
        $region33: #{tpu_custom_call.1} parent=31 // pred_check
          %p203 = pneg %p38
        $region34: #{tpu_custom_call.1} parent=31 // pred_check_branch
          %205 = sbr.rel (%p203) target = $region36
        $region35: #{tpu_custom_call.1} parent=31 // pred_region
          %s206 = sand.u32 %s28, 1
          %s207 = scalar_lea.sflag [#allocation3], %s206
          %s208 = sand.u32 %s28, 1
          %s209 = smul.addr %s208, 8
          %s210 = scalar_lea.vmem [#allocation2], %s209
          %s212 = ssub.s32 128, 128
          %213 = vsyncadd %s207, %s212
          %s214 = smul.addr %s18, 2
          %s215 = smul.addr %s214, 64
          %s216 = scalar_lea.hbm %s0, %s215
          %s218 = sshll.u32 %s210, 4
          %s219 = int_to_ptr.vmem [resolvable:$true] %s218
          %221 = dma.hbm_to_vmem [thread:$0]  %s216, 128, %s219, %s207
        $region36: #{tpu_custom_call.1} parent=31 // pred_fallthru
          _
      $region32: #{tpu_custom_call.1} parent=5 // pred_fallthru
        _
      %p222 = scmp.le.s32.totalorder 1, %s18
      %p223 = scmp.lt.s32.totalorder %s18, 3
      %p224 = pnand %p222, %p223
      %p225 = pneg %p224
      // Predicated region
      $region37: #{tpu_custom_call.1} parent=5 // pred_check
        _
      $region38: #{tpu_custom_call.1} parent=5 // pred_check_branch
        %227 = sbr.rel (%p224) target = $region40
      $region39: #{tpu_custom_call.1} parent=5 // pred_region
        %s228 = ssub.s32 %s18, 1
        %s229 = sand.u32 %s31, 1
        %s230 = scalar_lea.sflag [#allocation3], %s229
        %s231 = sand.u32 %s31, 1
        %s232 = smul.addr %s231, 8
        %s233 = scalar_lea.vmem [#allocation2], %s232
        // Predicated region
        $region41: #{tpu_custom_call.1} parent=39 // pred_check
          %p234 = pneg %p44
        $region42: #{tpu_custom_call.1} parent=39 // pred_check_branch
          %236 = sbr.rel (%p234) target = $region44
        $region43: #{tpu_custom_call.1} parent=39 // pred_region
          %237 = dma.done %s230, 128
        $region44: #{tpu_custom_call.1} parent=39 // pred_fallthru
          _
        // Predicated region
        $region45: #{tpu_custom_call.1} parent=39 // pred_check
          %p238 = pneg %p86
        $region46: #{tpu_custom_call.1} parent=39 // pred_check_branch
          %240 = sbr.rel (%p238) target = $region48
        $region47: #{tpu_custom_call.1} parent=39 // pred_region
          %241 = dma.done [#allocation6], 128
        $region48: #{tpu_custom_call.1} parent=39 // pred_fallthru
          _
        // Predicated region
        $region49: #{tpu_custom_call.1} parent=39 // pred_check
          %p242 = pneg %p107
        $region50: #{tpu_custom_call.1} parent=39 // pred_check_branch
          %244 = sbr.rel (%p242) target = $region52
        $region51: #{tpu_custom_call.1} parent=39 // pred_region
          %245 = dma.done [#allocation6], 512
        $region52: #{tpu_custom_call.1} parent=39 // pred_fallthru
          _
        %s246 = sand.u32 %s31, 1
        %s247 = scalar_lea.sflag [#allocation3], %s246
        %s248 = sand.u32 %s31, 1
        %s249 = smul.addr %s248, 8
        %s250 = scalar_lea.vmem [#allocation2], %s249
        %p251 = pneg %p44
        %p252 = pneg %p41
        %p253 = pneg %p65
        %p254 = pneg %p62
        %p255 = pneg %p86
        %p256 = pneg %p83
        %p257 = pneg %p107
        %p258 = pneg %p104
        %p259 = pneg %p128
        %p260 = pneg %p125
        %p261 = pneg %p154
        %p262 = pneg %p151
        %s263 = sand.u32 %s141, 1
        %s264 = scalar_lea.sflag [#allocation4], %s263
        %s265 = sand.u32 %s141, 1
        %s266 = smul.addr %s265, 16
        %s267 = scalar_lea.vmem [#allocation8], %s266
        %v268 = vld [vmem:[%s1] sm:$0xff]
        %v269 = vld [vmem:[#allocation5] sm:$0xff]
        %v270 = vld [vmem:[%s4] sm:$0xff]
        %v271 = vld [vmem:[%s233] sm:$0xff]
        %v273 = vcombine.high %v271, %v271
        %275 = vrot.lane.b32.xlu0 %v271, 17
        %v276 = vpop.permute.xlu0 %275
        %277 = vrot.lane.b32.xlu0 %v273, 17
        %v278 = vpop.permute.xlu0 %277
        %v279 = vlaneseq
        %v280 = vand.u32 %v279, 127
        %vm281 = vcmp.lt.s32.totalorder %v280, 17
        %v282 = vsel %vm281, %v276, %v278
        %v283 = vsel %vm281, %v278, %v276
        %v284 = vld [vmem:[#allocation7] ss:$8 sm:$0x3]
        %v286 = vlaneseq
        %v287 = vshrl.u32 %v286, 7
        %v288 = vsub.s32 0, %v287
        %v289 = vrot.slane %v284, %v288
        %v290 = vlaneseq
        %v291 = vshrl.u32 %v290, 7
        %v292 = vsub.s32 1, %v291
        %v293 = vrot.slane %v284, %v292
        %v296 = vmul.f32 %v283, %v289
        %v297 = vmul.f32 %v282, %v293
        %298 = vrot.lane.b32.xlu0 %v271, 16
        %v299 = vpop.permute.xlu0 %298
        %300 = vrot.lane.b32.xlu0 %v273, 16
        %v301 = vpop.permute.xlu0 %300
        %vm302 = vcmp.lt.s32.totalorder %v280, 16
        %v303 = vsel %vm302, %v299, %v301
        %v304 = vsel %vm302, %v301, %v299
        %s305 = scalar_lea.vmem [#allocation7], 1
        %v306 = vld [vmem:[%s305] ss:$8 sm:$0x3]
        %v308 = vlaneseq
        %v309 = vshrl.u32 %v308, 7
        %v310 = vsub.s32 0, %v309
        %v311 = vrot.slane %v306, %v310
        %v312 = vlaneseq
        %v313 = vshrl.u32 %v312, 7
        %v314 = vsub.s32 1, %v313
        %v315 = vrot.slane %v306, %v314
        %v318 = vmul.f32 %v304, %v311
        %v319 = vmul.f32 %v303, %v315
        %320 = vrot.lane.b32.xlu0 %v271, 15
        %v321 = vpop.permute.xlu0 %320
        %322 = vrot.lane.b32.xlu0 %v273, 15
        %v323 = vpop.permute.xlu0 %322
        %vm324 = vcmp.lt.s32.totalorder %v280, 15
        %v325 = vsel %vm324, %v321, %v323
        %v326 = vsel %vm324, %v323, %v321
        %s327 = scalar_lea.vmem [#allocation7], 2
        %v328 = vld [vmem:[%s327] ss:$8 sm:$0x3]
        %v330 = vlaneseq
        %v331 = vshrl.u32 %v330, 7
        %v332 = vsub.s32 0, %v331
        %v333 = vrot.slane %v328, %v332
        %v334 = vlaneseq
        %v335 = vshrl.u32 %v334, 7
        %v336 = vsub.s32 1, %v335
        %v337 = vrot.slane %v328, %v336
        %v340 = vmul.f32 %v326, %v333
        %v341 = vmul.f32 %v325, %v337
        %342 = vrot.lane.b32.xlu0 %v271, 1
        %v343 = vpop.permute.xlu0 %342
        %344 = vrot.lane.b32.xlu0 %v273, 1
        %v345 = vpop.permute.xlu0 %344
        %vm346 = vcmp.lt.s32.totalorder %v280, 1
        %v347 = vsel %vm346, %v343, %v345
        %v348 = vsel %vm346, %v345, %v343
        %s349 = scalar_lea.vmem [#allocation7], 3
        %v350 = vld [vmem:[%s349] ss:$8 sm:$0x3]
        %v352 = vlaneseq
        %v353 = vshrl.u32 %v352, 7
        %v354 = vsub.s32 0, %v353
        %v355 = vrot.slane %v350, %v354
        %v356 = vlaneseq
        %v357 = vshrl.u32 %v356, 7
        %v358 = vsub.s32 1, %v357
        %v359 = vrot.slane %v350, %v358
        %v362 = vmul.f32 %v348, %v355
        %v363 = vmul.f32 %v347, %v359
        %364 = vrot.lane.b32.xlu0 %v271, 127
        %v365 = vpop.permute.xlu0 %364
        %366 = vrot.lane.b32.xlu0 %v273, 127
        %v367 = vpop.permute.xlu0 %366
        %vm368 = vcmp.lt.s32.totalorder %v280, 127
        %v369 = vsel %vm368, %v365, %v367
        %v370 = vsel %vm368, %v367, %v365
        %s371 = scalar_lea.vmem [#allocation7], 5
        %v372 = vld [vmem:[%s371] ss:$8 sm:$0x3]
        %v374 = vlaneseq
        %v375 = vshrl.u32 %v374, 7
        %v376 = vsub.s32 0, %v375
        %v377 = vrot.slane %v372, %v376
        %v378 = vlaneseq
        %v379 = vshrl.u32 %v378, 7
        %v380 = vsub.s32 1, %v379
        %v381 = vrot.slane %v372, %v380
        %v384 = vmul.f32 %v369, %v377
        %v385 = vmul.f32 %v370, %v381
        %386 = vrot.lane.b32.xlu0 %v271, 113
        %v387 = vpop.permute.xlu0 %386
        %388 = vrot.lane.b32.xlu0 %v273, 113
        %v389 = vpop.permute.xlu0 %388
        %vm390 = vcmp.lt.s32.totalorder %v280, 113
        %v391 = vsel %vm390, %v387, %v389
        %v392 = vsel %vm390, %v389, %v387
        %s393 = scalar_lea.vmem [#allocation7], 6
        %v394 = vld [vmem:[%s393] ss:$8 sm:$0x3]
        %v396 = vlaneseq
        %v397 = vshrl.u32 %v396, 7
        %v398 = vsub.s32 0, %v397
        %v399 = vrot.slane %v394, %v398
        %v400 = vlaneseq
        %v401 = vshrl.u32 %v400, 7
        %v402 = vsub.s32 1, %v401
        %v403 = vrot.slane %v394, %v402
        %v406 = vmul.f32 %v391, %v399
        %v407 = vmul.f32 %v392, %v403
        %408 = vrot.lane.b32.xlu0 %v271, 112
        %v409 = vpop.permute.xlu0 %408
        %410 = vrot.lane.b32.xlu0 %v273, 112
        %v411 = vpop.permute.xlu0 %410
        %vm412 = vcmp.lt.s32.totalorder %v280, 112
        %v413 = vsel %vm412, %v409, %v411
        %v414 = vsel %vm412, %v411, %v409
        %s415 = scalar_lea.vmem [#allocation7], 7
        %v416 = vld [vmem:[%s415] ss:$8 sm:$0x3]
        %v418 = vlaneseq
        %v419 = vshrl.u32 %v418, 7
        %v420 = vsub.s32 0, %v419
        %v421 = vrot.slane %v416, %v420
        %v422 = vlaneseq
        %v423 = vshrl.u32 %v422, 7
        %v424 = vsub.s32 1, %v423
        %v425 = vrot.slane %v416, %v424
        %v428 = vmul.f32 %v413, %v421
        %v429 = vmul.f32 %v414, %v425
        %430 = vrot.lane.b32.xlu0 %v271, 111
        %v431 = vpop.permute.xlu0 %430
        %432 = vrot.lane.b32.xlu0 %v273, 111
        %v433 = vpop.permute.xlu0 %432
        %vm434 = vcmp.lt.s32.totalorder %v280, 111
        %v435 = vsel %vm434, %v431, %v433
        %v436 = vsel %vm434, %v433, %v431
        %s437 = scalar_lea.vmem [#allocation7], 16
        %v438 = vld [vmem:[%s437] ss:$8 sm:$0x3]
        %v440 = vlaneseq
        %v441 = vshrl.u32 %v440, 7
        %v442 = vsub.s32 0, %v441
        %v443 = vrot.slane %v438, %v442
        %v444 = vlaneseq
        %v445 = vshrl.u32 %v444, 7
        %v446 = vsub.s32 1, %v445
        %v447 = vrot.slane %v438, %v446
        %v450 = vmul.f32 %v435, %v443
        %v451 = vmul.f32 %v436, %v447
        %v454 = vrot.slane %v318, 4
        %v455 = vrot.slane %v319, 4
        %v460 = vrot.slane %v362, 4
        %v461 = vrot.slane %v363, 4
        %v466 = vrot.slane %v384, 4
        %v467 = vrot.slane %v385, 4
        %v472 = vrot.slane %v428, 4
        %v473 = vrot.slane %v429, 4
        %vm476 = vcmask 1043456
        %v477 = vsel %vm476, %v296, %v454
        %v478 = vsel %vm476, %v297, %v455
        %v479 = vsel %vm476, %v340, %v460
        %v480 = vsel %vm476, %v341, %v461
        %v481 = vsel %vm476, %v271, %v466
        %v482 = vsel %vm476, %v273, %v467
        %v483 = vsel %vm476, %v406, %v472
        %v484 = vsel %vm476, %v407, %v473
        %vm485 = vcmask 293888
        %v487 = vsel %vm485, %v268, 0
        %v490 = vsel %vm476, %v450, 0
        %v493 = vsel %vm476, %v451, 0
        %495 = vmatprep.subr.mxu0 0.0
        %496 = vmatpush1.msra.mxu0 0.0
        %497 = vmatprep.subr.mxu0 0.0
        %498 = vmatpush1.msra.mxu0 0.0
        %499 = vmatprep.subr.mxu0 0.0
        %500 = vmatpush1.msra.mxu0 0.0
        %501 = vmatprep.subr.mxu0 0.0
        %502 = vmatpush1.msra.mxu0 0.0
        %503 = vmatprep.subr.mxu0 0.0
        %504 = vmatpush1.msra.mxu0 0.0
        %505 = vmatprep.subr.mxu0 0.0
        %506 = vmatpush1.msra.mxu0 0.0
        %507 = vmatprep.subr.mxu0 0.0
        %508 = vmatpush1.msra.mxu0 0.0
        %509 = vmatprep.subr.mxu0 0.0
        %510 = vmatpush1.msra.mxu0 0.0
        %511 = vmatprep.subr.mxu0 0.0
        %512 = vmatpush1.msra.mxu0 0.0
        %513 = vmatprep.subr.mxu0 0.0
        %514 = vmatpush1.msra.mxu0 0.0
        %515 = vmatprep.subr.mxu0 0.0
        %516 = vmatpush1.msra.mxu0 0.0
        %517 = vmatprep.subr.mxu0 %v493
        %518 = vmatpush1.msra.mxu0 %v490
        %519 = vmatprep.subr.mxu0 %v484
        %520 = vmatpush1.msra.mxu0 %v483
        %521 = vmatprep.subr.mxu0 %v482
        %522 = vmatpush1.msra.mxu0 %v481
        %523 = vmatprep.subr.mxu0 %v480
        %524 = vmatpush1.msra.mxu0 %v479
        %525 = vmatprep.subr.mxu0 %v478
        %526 = vmatpush1.msra.mxu0 %v477
        %527 = vmatprep.subr.mxu0 0.0
        %528 = vmatpush2.msra.mxu0 0.0
        %529 = vmatprep.subr.mxu0 0.0
        %530 = vmatpush2.msra.mxu0 0.0
        %531 = vmatprep.subr.mxu0 0.0
        %532 = vmatpush2.msra.mxu0 0.0
        %533 = vmatprep.subr.mxu0 0.0
        %534 = vmatpush2.msra.mxu0 0.0
        %535 = vmatprep.subr.mxu0 0.0
        %536 = vmatpush2.msra.mxu0 0.0
        %537 = vmatprep.subr.mxu0 0.0
        %538 = vmatpush2.msra.mxu0 0.0
        %539 = vmatprep.subr.mxu0 0.0
        %540 = vmatpush2.msra.mxu0 0.0
        %541 = vmatprep.subr.mxu0 0.0
        %542 = vmatpush2.msra.mxu0 0.0
        %543 = vmatprep.subr.mxu0 0.0
        %544 = vmatpush2.msra.mxu0 0.0
        %545 = vmatprep.subr.mxu0 0.0
        %546 = vmatpush2.msra.mxu0 0.0
        %547 = vmatprep.subr.mxu0 0.0
        %548 = vmatpush2.msra.mxu0 0.0
        %549 = vmatprep.subr.mxu0 0.0
        %550 = vmatpush2.msra.mxu0 0.0
        %551 = vmatprep.subr.mxu0 0.0
        %552 = vmatpush2.msra.mxu0 0.0
        %553 = vmatprep.subr.mxu0 0.0
        %554 = vmatpush2.msra.mxu0 0.0
        %555 = vmatprep.subr.mxu0 0.0
        %556 = vmatpush2.msra.mxu0 0.0
        %557 = vmatprep.subr.mxu0 0.0
        %558 = vmatpush2.msra.mxu0 0.0
        %559 = vmatprep.mubr.f32.mxu0 0.0
        %560 = vmatmul.mubr.f32.gmra.mxu0 %v487
        %v561 = vpop.f32.mrf.mxu0
        %v562 = vadd.f32 0.0, %v561
        %v563 = vpop.f32.mrf.mxu0
        %v564 = vadd.f32 0.0, %v563
        %565 = vdwg.mxu0
        %567 = vset.pattern.permute.xlu0 9
        %568 = vperm.xlu0 %567, %v269
        %v569 = vpop.permute.xlu0 %568
        %v571 = vmul.f32 %v562, %v569
        %v572 = vmul.f32 %v564, %v569
        %573 = vset.pattern.permute.xlu0 10
        %574 = vperm.xlu0 %573, %v269
        %v575 = vpop.permute.xlu0 %574
        %v577 = vadd.f32 %v571, %v575
        %v578 = vadd.f32 %v572, %v575
        %v579 = vmax.f32 %v577, 0.0
        %v580 = vmax.f32 %v578, 0.0
        %581 = vset.pattern.permute.xlu0 4
        %582 = vperm.xlu0 %581, %v269
        %v583 = vpop.permute.xlu0 %582
        %v585 = vmul.f32 %v579, %v583
        %v586 = vmul.f32 %v580, %v583
        %587 = vrot.lane.b32.xlu0 %v579, 17
        %v588 = vpop.permute.xlu0 %587
        %589 = vrot.lane.b32.xlu0 %v580, 17
        %v590 = vpop.permute.xlu0 %589
        %v591 = vsel %vm281, %v588, %v590
        %v592 = vsel %vm281, %v590, %v588
        %v593 = vmul.f32 %v592, %v289
        %v594 = vmul.f32 %v591, %v293
        %595 = vset.pattern.permute.xlu0 0
        %596 = vperm.xlu0 %595, %v269
        %v597 = vpop.permute.xlu0 %596
        %v599 = vmul.f32 %v593, %v597
        %v600 = vmul.f32 %v594, %v597
        %v601 = vadd.f32 %v585, %v599
        %v602 = vadd.f32 %v586, %v600
        %603 = vrot.lane.b32.xlu0 %v579, 16
        %v604 = vpop.permute.xlu0 %603
        %605 = vrot.lane.b32.xlu0 %v580, 16
        %v606 = vpop.permute.xlu0 %605
        %v607 = vsel %vm302, %v604, %v606
        %v608 = vsel %vm302, %v606, %v604
        %v609 = vmul.f32 %v608, %v311
        %v610 = vmul.f32 %v607, %v315
        %611 = vset.pattern.permute.xlu0 1
        %612 = vperm.xlu0 %611, %v269
        %v613 = vpop.permute.xlu0 %612
        %v615 = vmul.f32 %v609, %v613
        %v616 = vmul.f32 %v610, %v613
        %v617 = vadd.f32 %v601, %v615
        %v618 = vadd.f32 %v602, %v616
        %619 = vrot.lane.b32.xlu0 %v579, 15
        %v620 = vpop.permute.xlu0 %619
        %621 = vrot.lane.b32.xlu0 %v580, 15
        %v622 = vpop.permute.xlu0 %621
        %v623 = vsel %vm324, %v620, %v622
        %v624 = vsel %vm324, %v622, %v620
        %v625 = vmul.f32 %v624, %v333
        %v626 = vmul.f32 %v623, %v337
        %627 = vset.pattern.permute.xlu0 2
        %628 = vperm.xlu0 %627, %v269
        %v629 = vpop.permute.xlu0 %628
        %v631 = vmul.f32 %v625, %v629
        %v632 = vmul.f32 %v626, %v629
        %v633 = vadd.f32 %v617, %v631
        %v634 = vadd.f32 %v618, %v632
        %635 = vrot.lane.b32.xlu0 %v579, 1
        %v636 = vpop.permute.xlu0 %635
        %637 = vrot.lane.b32.xlu0 %v580, 1
        %v638 = vpop.permute.xlu0 %637
        %v639 = vsel %vm346, %v636, %v638
        %v640 = vsel %vm346, %v638, %v636
        %v641 = vmul.f32 %v640, %v355
        %v642 = vmul.f32 %v639, %v359
        %643 = vset.pattern.permute.xlu0 3
        %644 = vperm.xlu0 %643, %v269
        %v645 = vpop.permute.xlu0 %644
        %v647 = vmul.f32 %v641, %v645
        %v648 = vmul.f32 %v642, %v645
        %v649 = vadd.f32 %v633, %v647
        %v650 = vadd.f32 %v634, %v648
        %651 = vrot.lane.b32.xlu0 %v579, 127
        %v652 = vpop.permute.xlu0 %651
        %653 = vrot.lane.b32.xlu0 %v580, 127
        %v654 = vpop.permute.xlu0 %653
        %v655 = vsel %vm368, %v652, %v654
        %v656 = vsel %vm368, %v654, %v652
        %v657 = vmul.f32 %v655, %v377
        %v658 = vmul.f32 %v656, %v381
        %659 = vset.pattern.permute.xlu0 5
        %660 = vperm.xlu0 %659, %v269
        %v661 = vpop.permute.xlu0 %660
        %v663 = vmul.f32 %v657, %v661
        %v664 = vmul.f32 %v658, %v661
        %v665 = vadd.f32 %v649, %v663
        %v666 = vadd.f32 %v650, %v664
        %667 = vrot.lane.b32.xlu0 %v579, 113
        %v668 = vpop.permute.xlu0 %667
        %669 = vrot.lane.b32.xlu0 %v580, 113
        %v670 = vpop.permute.xlu0 %669
        %v671 = vsel %vm390, %v668, %v670
        %v672 = vsel %vm390, %v670, %v668
        %v673 = vmul.f32 %v671, %v399
        %v674 = vmul.f32 %v672, %v403
        %675 = vset.pattern.permute.xlu0 6
        %676 = vperm.xlu0 %675, %v269
        %v677 = vpop.permute.xlu0 %676
        %v679 = vmul.f32 %v673, %v677
        %v680 = vmul.f32 %v674, %v677
        %v681 = vadd.f32 %v665, %v679
        %v682 = vadd.f32 %v666, %v680
        %683 = vrot.lane.b32.xlu0 %v579, 112
        %v684 = vpop.permute.xlu0 %683
        %685 = vrot.lane.b32.xlu0 %v580, 112
        %v686 = vpop.permute.xlu0 %685
        %v687 = vsel %vm412, %v684, %v686
        %v688 = vsel %vm412, %v686, %v684
        %v689 = vmul.f32 %v687, %v421
        %v690 = vmul.f32 %v688, %v425
        %691 = vset.pattern.permute.xlu0 7
        %692 = vperm.xlu0 %691, %v269
        %v693 = vpop.permute.xlu0 %692
        %v695 = vmul.f32 %v689, %v693
        %v696 = vmul.f32 %v690, %v693
        %v697 = vadd.f32 %v681, %v695
        %v698 = vadd.f32 %v682, %v696
        %699 = vrot.lane.b32.xlu0 %v579, 111
        %v700 = vpop.permute.xlu0 %699
        %701 = vrot.lane.b32.xlu0 %v580, 111
        %v702 = vpop.permute.xlu0 %701
        %v703 = vsel %vm434, %v700, %v702
        %v704 = vsel %vm434, %v702, %v700
        %v705 = vmul.f32 %v703, %v443
        %v706 = vmul.f32 %v704, %v447
        %707 = vset.pattern.permute.xlu0 8
        %708 = vperm.xlu0 %707, %v269
        %v709 = vpop.permute.xlu0 %708
        %v711 = vmul.f32 %v705, %v709
        %v712 = vmul.f32 %v706, %v709
        %v713 = vadd.f32 %v697, %v711
        %v714 = vadd.f32 %v698, %v712
        %715 = vset.pattern.permute.xlu0 11
        %716 = vperm.xlu0 %715, %v269
        %v717 = vpop.permute.xlu0 %716
        %v719 = vmul.f32 %v713, %v717
        %v720 = vmul.f32 %v714, %v717
        %721 = vset.pattern.permute.xlu0 12
        %722 = vperm.xlu0 %721, %v269
        %v723 = vpop.permute.xlu0 %722
        %v725 = vadd.f32 %v719, %v723
        %v726 = vadd.f32 %v720, %v723
        %728 = vset.pattern.permute.xlu0 0
        %729 = vperm.xlu0 %728, %v270
        %v730 = vpop.permute.xlu0 %729
        %v732 = vlaneseq
        %v733 = vshrl.u32 %v732, 7
        %v734 = vsub.s32 0, %v733
        %v735 = vrot.slane %v271, %v734
        %v736 = vlaneseq
        %v737 = vshrl.u32 %v736, 7
        %v738 = vsub.s32 4, %v737
        %v739 = vrot.slane %v271, %v738
        %v742 = vlaneseq
        %v743 = vshrl.u32 %v742, 7
        %v744 = vsub.s32 0, %v743
        %v745 = vrot.slane %v735, %v744
        %v746 = vlaneseq
        %v747 = vshrl.u32 %v746, 7
        %v748 = vsub.s32 0, %v747
        %v749 = vrot.slane %v739, %v748
        %v750 = vmul.f32 %v730, %v745
        %v751 = vmul.f32 %v730, %v749
        %752 = vset.pattern.permute.xlu0 1
        %753 = vperm.xlu0 %752, %v270
        %v754 = vpop.permute.xlu0 %753
        %v756 = vlaneseq
        %v757 = vshrl.u32 %v756, 7
        %v758 = vsub.s32 1, %v757
        %v759 = vrot.slane %v271, %v758
        %v760 = vlaneseq
        %v761 = vshrl.u32 %v760, 7
        %v762 = vsub.s32 5, %v761
        %v763 = vrot.slane %v271, %v762
        %v766 = vlaneseq
        %v767 = vshrl.u32 %v766, 7
        %v768 = vsub.s32 1, %v767
        %v769 = vrot.slane %v759, %v768
        %v770 = vlaneseq
        %v771 = vshrl.u32 %v770, 7
        %v772 = vsub.s32 1, %v771
        %v773 = vrot.slane %v763, %v772
        %v774 = vmul.f32 %v754, %v769
        %v775 = vmul.f32 %v754, %v773
        %v776 = vadd.f32 %v750, %v774
        %v777 = vadd.f32 %v751, %v775
        %778 = vset.pattern.permute.xlu0 2
        %779 = vperm.xlu0 %778, %v270
        %v780 = vpop.permute.xlu0 %779
        %v782 = vlaneseq
        %v783 = vshrl.u32 %v782, 7
        %v784 = vsub.s32 2, %v783
        %v785 = vrot.slane %v271, %v784
        %v786 = vlaneseq
        %v787 = vshrl.u32 %v786, 7
        %v788 = vsub.s32 6, %v787
        %v789 = vrot.slane %v271, %v788
        %v792 = vlaneseq
        %v793 = vshrl.u32 %v792, 7
        %v794 = vsub.s32 2, %v793
        %v795 = vrot.slane %v785, %v794
        %v796 = vlaneseq
        %v797 = vshrl.u32 %v796, 7
        %v798 = vsub.s32 2, %v797
        %v799 = vrot.slane %v789, %v798
        %v800 = vmul.f32 %v780, %v795
        %v801 = vmul.f32 %v780, %v799
        %v802 = vadd.f32 %v776, %v800
        %v803 = vadd.f32 %v777, %v801
        %804 = vset.pattern.permute.xlu0 3
        %805 = vperm.xlu0 %804, %v270
        %v806 = vpop.permute.xlu0 %805
        %v808 = vlaneseq
        %v809 = vshrl.u32 %v808, 7
        %v810 = vsub.s32 3, %v809
        %v811 = vrot.slane %v271, %v810
        %v812 = vlaneseq
        %v813 = vshrl.u32 %v812, 7
        %v814 = vsub.s32 7, %v813
        %v815 = vrot.slane %v271, %v814
        %v818 = vlaneseq
        %v819 = vshrl.u32 %v818, 7
        %v820 = vsub.s32 3, %v819
        %v821 = vrot.slane %v811, %v820
        %v822 = vlaneseq
        %v823 = vshrl.u32 %v822, 7
        %v824 = vsub.s32 3, %v823
        %v825 = vrot.slane %v815, %v824
        %v826 = vmul.f32 %v806, %v821
        %v827 = vmul.f32 %v806, %v825
        %v828 = vadd.f32 %v802, %v826
        %v829 = vadd.f32 %v803, %v827
        %830 = vset.pattern.permute.xlu0 13
        %831 = vperm.xlu0 %830, %v269
        %v832 = vpop.permute.xlu0 %831
        %v834 = vmul.f32 %v828, %v832
        %v835 = vmul.f32 %v829, %v832
        %836 = vset.pattern.permute.xlu0 14
        %837 = vperm.xlu0 %836, %v269
        %v838 = vpop.permute.xlu0 %837
        %v840 = vadd.f32 %v834, %v838
        %v841 = vadd.f32 %v835, %v838
        %v842 = vadd.f32 %v725, %v840
        %v843 = vadd.f32 %v726, %v841
        %v844 = vmax.f32 %v842, 0.0
        %v845 = vmax.f32 %v843, 0.0
        %846 = vst [vmem:[%s267] sm:$0xff] %v844
        %847 = vst [vmem:[%s267 + $0x8] sm:$0xff] %v845
        %s848 = sand.u32 %s141, 1
        %s849 = scalar_lea.sflag [#allocation4], %s848
        %s850 = sand.u32 %s141, 1
        %s851 = smul.addr %s850, 16
        %s852 = scalar_lea.vmem [#allocation8], %s851
        // Predicated region
        $region53: #{tpu_custom_call.1} parent=39 // pred_check
          %p853 = pneg %p151
        $region54: #{tpu_custom_call.1} parent=39 // pred_check_branch
          %855 = sbr.rel (%p853) target = $region56
        $region55: #{tpu_custom_call.1} parent=39 // pred_region
          %s857 = ssub.s32 256, 256
          %858 = vsyncadd %s849, %s857
          %s859 = smul.addr %s23, 2
          %s860 = smul.addr %s859, 128
          %s861 = scalar_lea.hbm %s5, %s860
          %s863 = sshll.u32 %s852, 4
          %s864 = int_to_ptr.vmem [resolvable:$true] %s863
          %866 = dma.vmem_to_hbm [thread:$0]  %s864, 256, %s861, %s849
        $region56: #{tpu_custom_call.1} parent=39 // pred_fallthru
          _
      $region40: #{tpu_custom_call.1} parent=5 // pred_fallthru
        _
      %p867 = scmp.le.s32.totalorder 2, %s18
      // Predicated region
      $region57: #{tpu_custom_call.1} parent=5 // pred_check
        %p868 = pneg %p867
      $region58: #{tpu_custom_call.1} parent=5 // pred_check_branch
        %870 = sbr.rel (%p868) target = $region60
      $region59: #{tpu_custom_call.1} parent=5 // pred_region
        %s871 = ssub.s32 %s18, 2
        // Predicated region
        $region61: #{tpu_custom_call.1} parent=59 // pred_check
          %p872 = pneg %p157
        $region62: #{tpu_custom_call.1} parent=59 // pred_check_branch
          %874 = sbr.rel (%p872) target = $region64
        $region63: #{tpu_custom_call.1} parent=59 // pred_region
          %s875 = sand.u32 %s142, 1
          %s876 = scalar_lea.sflag [#allocation4], %s875
          %s877 = sand.u32 %s142, 1
          %s878 = smul.addr %s877, 16
          %s879 = scalar_lea.vmem [#allocation8], %s878
          %880 = dma.done %s876, 256
        $region64: #{tpu_custom_call.1} parent=59 // pred_fallthru
          _
      $region60: #{tpu_custom_call.1} parent=5 // pred_fallthru
        _
    $region6: #{tpu_custom_call.1} parent=1 // loop_footer
      %s22 = sadd.s32 1, %s18
    $region7: #{tpu_custom_call.1} parent=1 // loop_footer_branch
      %17 = sbr.rel target = $region3
    $region8: #{tpu_custom_call.1} parent=1 // loop_exit
      _
    %881 = vsyncpa [#allocation3], 1
    %s882 = scalar_lea.sflag [#allocation3], 1
    %883 = vsyncpa %s882, 1
    %884 = vsyncpa [#allocation6], 1
    %885 = vsyncpa [#allocation4], 1
    %s886 = scalar_lea.sflag [#allocation4], 1
    %887 = vsyncpa %s886, 1

</llo_original>
